<compile_context>
chip_gen: v5e
topology: v5e:2x2
jax: 0.10.0
libtpu: 0.0.40
codegen_flags: <defaults>
</compile_context>

<pallas_src>
import functools
import math

import jax
import jax.numpy as jnp
from jax import lax
from jax.experimental import pallas as pl
from jax.experimental.pallas import tpu as pltpu


def _build_operators(h, w):
    """Fold fft/fftshift and ifftshift/ifft (+ balanced scaling) into dense
    complex operators (applied on the left for rows, on the right for cols).
    Balanced scaling keeps every operator ~unitary so intermediate magnitudes
    stay O(1) on the bf16 MXU path."""
    Ih = jnp.eye(h, dtype=jnp.complex64)
    Iw = jnp.eye(w, dtype=jnp.complex64)
    Fh = jnp.fft.fft(Ih, axis=0)        # Fh @ X  == fft(X, axis=0)
    Fw = jnp.fft.fft(Iw, axis=0)        # X @ Fw  == fft(X, axis=1) (DFT symmetric)
    IFh = jnp.fft.ifft(Ih, axis=0)
    IFw = jnp.fft.ifft(Iw, axis=0)
    Ph = jnp.fft.fftshift(Ih, axes=0)   # Ph @ Y  == fftshift(Y, axis=0)
    Pw = jnp.fft.fftshift(Iw, axes=1)   # Y @ Pw  == fftshift(Y, axis=1)
    Qh = jnp.fft.ifftshift(Ih, axes=0)
    Qw = jnp.fft.ifftshift(Iw, axes=1)

    Lf = ((1.0 / math.sqrt(h)) * (Ph @ Fh)).astype(jnp.complex64)
    Rf = ((1.0 / math.sqrt(w)) * (Fw @ Pw)).astype(jnp.complex64)
    Li = (math.sqrt(h) * (IFh @ Qh)).astype(jnp.complex64)
    Ri = (math.sqrt(w) * (Qw @ IFw)).astype(jnp.complex64)
    return Lf, Rf, Li, Ri


def _make_kernel(w, r0, r1, c0, c1):
    """Kernel over one batch chunk.  All slabs are (h, N) with N = bc*w lanes
    (bc batches tiled contiguously along the lane axis); real and imaginary
    parts are separate refs, so no lane-axis concat/slice is ever emitted."""

    def kernel(xr_ref, xi_ref, fsr_ref, fsi_ref,
               lfr_ref, lfi_ref, lir_ref, lii_ref,
               rfr_ref, rfi_ref, rir_ref, rii_ref,
               yr_ref, yi_ref):
        xr = xr_ref[...]                                  # bf16 (h, N)
        xi = xi_ref[...]

        # ---- k_hr = (1/sqrt(hw)) * fftshift(fft2(x)) --------------------
        # rows: complex left operator Lf (h, h)
        tr = (jnp.dot(lfr_ref[...], xr, preferred_element_type=jnp.float32)
              - jnp.dot(lfi_ref[...], xi, preferred_element_type=jnp.float32))
        ti = (jnp.dot(lfi_ref[...], xr, preferred_element_type=jnp.float32)
              + jnp.dot(lfr_ref[...], xi, preferred_element_type=jnp.float32))
        trb = tr.astype(jnp.bfloat16)
        tib = ti.astype(jnp.bfloat16)
        # cols: complex right operator Rf ((N, N), block-diag over folded batches)
        kr = (jnp.dot(trb, rfr_ref[...], preferred_element_type=jnp.float32)
              - jnp.dot(tib, rfi_ref[...], preferred_element_type=jnp.float32))
        ki = (jnp.dot(trb, rfi_ref[...], preferred_element_type=jnp.float32)
              + jnp.dot(tib, rfr_ref[...], preferred_element_type=jnp.float32))

        # ---- data consistency --------------------------------------------
        # mask1 == 0 inside the centre box (keep k_hr), == 1 outside (take FS).
        # Generated on the VPU from iota -- no (h, N) f32 mask stream from HBM.
        rows = lax.broadcasted_iota(jnp.int32, kr.shape, 0)
        cols = lax.broadcasted_iota(jnp.int32, kr.shape, 1) % w   # col within plane
        keep_hr = (rows >= r0) & (rows < r1) & (cols >= c0) & (cols < c1)
        kr = jnp.where(keep_hr, kr, fsr_ref[...])
        ki = jnp.where(keep_hr, ki, fsi_ref[...])

        # ---- x_res = sqrt(hw) * ifft2(ifftshift(k_out)) -------------------
        krb = kr.astype(jnp.bfloat16)
        kib = ki.astype(jnp.bfloat16)
        ur = (jnp.dot(lir_ref[...], krb, preferred_element_type=jnp.float32)
              - jnp.dot(lii_ref[...], kib, preferred_element_type=jnp.float32))
        ui = (jnp.dot(lii_ref[...], krb, preferred_element_type=jnp.float32)
              + jnp.dot(lir_ref[...], kib, preferred_element_type=jnp.float32))
        urb = ur.astype(jnp.bfloat16)
        uib = ui.astype(jnp.bfloat16)
        yr_ref[...] = (jnp.dot(urb, rir_ref[...], preferred_element_type=jnp.float32)
                       - jnp.dot(uib, rii_ref[...], preferred_element_type=jnp.float32))
        yi_ref[...] = (jnp.dot(urb, rii_ref[...], preferred_element_type=jnp.float32)
                       + jnp.dot(uib, rir_ref[...], preferred_element_type=jnp.float32))

    return kernel


@functools.partial(jax.jit, static_argnums=(2, 3))
def data_consistency(FSsr, hr, shape1, shape2):
    """FSsr: complex64 [b,1,h,w]; hr: float32 [b,c>=2,h,w] (real in ch0, imag
    in ch1 -- extra channels are ignored, exactly as in the PyTorch module);
    shape1/shape2: static ints.  Returns float32 [b,2,h,w] = concat(real, imag)."""
    b, c, h, w = hr.shape

    # ---- batch folding / chunking -----------------------------------------
    #  * w >= 128: already lane-dense -> one image per grid step (no kron);
    #    the batch grid axis is "parallel" so v7x's two TCs split it.
    #  * w  < 128: fold ceil(128/w) batches into the lane axis (zero-padding
    #    the batch) so loads/stores are lane-dense; the column operators then
    #    get a block-diagonal kron(I_bc, R) embedding.
    if w >= 128:
        bc = 1
    else:
        bc = -(-128 // w)
    n_chunks = -(-b // bc)
    b_pad = n_chunks * bc
    N = bc * w
    if n_chunks > 1 and N % 128 != 0:
        # keep blocked lane tiles 128-aligned; otherwise collapse to a single
        # full-width chunk (block == full array dims is always legal).
        bc, n_chunks, b_pad, N = b, 1, b, b * w
    # TODO(synk): per-batch unrolled column transform (or a two-stage
    # Cooley-Tukey split for very large planes) to drop the kron's bc x MXU
    # waste when batches are folded.

    xr = hr[:, 0]
    xi = hr[:, 1]
    fsr = jnp.real(FSsr[:, 0]).astype(jnp.float32)
    fsi = jnp.imag(FSsr[:, 0]).astype(jnp.float32)
    if b_pad != b:
        pad = ((0, b_pad - b), (0, 0), (0, 0))
        xr, xi = jnp.pad(xr, pad), jnp.pad(xi, pad)
        fsr, fsi = jnp.pad(fsr, pad), jnp.pad(fsi, pad)

    def to_slab(x, dtype):     # (b_pad,h,w) -> (h, n_chunks*N), chunk-major lanes
        x = jnp.transpose(x.reshape(n_chunks, bc, h, w), (2, 0, 1, 3))
        return x.reshape(h, n_chunks * N).astype(dtype)

    # x only feeds bf16 MXU matmuls -> ship it bf16 (halves that input stream);
    # FS is injected into k-space in f32, so keep it f32.
    xr_s = to_slab(xr, jnp.bfloat16)
    xi_s = to_slab(xi, jnp.bfloat16)
    fsr_s = to_slab(fsr, jnp.float32)
    fsi_s = to_slab(fsi, jnp.float32)

    # ---- operators ---------------------------------------------------------
    # TODO(synk): for very large h consider f32 (or split-bf16) row operators;
    # bf16 DFT error grows roughly as sqrt(h) per transform.
    Lf, Rf, Li, Ri = _build_operators(h, w)
    lf_r = jnp.real(Lf).astype(jnp.bfloat16)
    lf_i = jnp.imag(Lf).astype(jnp.bfloat16)
    li_r = jnp.real(Li).astype(jnp.bfloat16)
    li_i = jnp.imag(Li).astype(jnp.bfloat16)

    def right_op(part):        # (w,w) -> (N,N): block-diag over folded batches
        part = part.astype(jnp.float32)
        if bc > 1:
            part = jnp.kron(jnp.eye(bc, dtype=jnp.float32), part)
        return part.astype(jnp.bfloat16)

    rf_r, rf_i = right_op(jnp.real(Rf)), right_op(jnp.imag(Rf))
    ri_r, ri_i = right_op(jnp.real(Ri)), right_op(jnp.imag(Ri))

    # ---- static mask-box bounds --------------------------------------------
    r0 = h // 2 - shape1 // 2
    r1 = h // 2 + math.ceil(shape1 / 2)
    c0 = w // 2 - shape2 // 2
    c1 = w // 2 + math.ceil(shape2 / 2)

    # ---- specs / compiler params --------------------------------------------
    slab_spec = pl.BlockSpec((h, N), lambda i: (0, i))
    op_h_spec = pl.BlockSpec((h, h), lambda i: (0, 0))    # grid-invariant
    op_n_spec = pl.BlockSpec((N, N), lambda i: (0, 0))    # grid-invariant
    # TODO(synk): single-buffer the grid-invariant operator inputs
    # (pipeline_mode=pl.Buffered(1)) once confirmed on this pipeline path;
    # the vmem budget below already accounts for their double buffers.

    slab_bytes = h * N * 4
    op_bytes = (4 * h * h + 4 * N * N) * 2                # bf16 operators
    need = 2 * (2 * h * N * 2 + 4 * slab_bytes + op_bytes) + 10 * slab_bytes
    try:
        phys = int(getattr(pltpu.get_tpu_info(), "vmem_capacity_bytes",
                           64 * 2 ** 20))
    except Exception:  # interpret mode / older runtimes
        phys = 64 * 2 ** 20
    vmem_limit = int(min(max(2 * need, 32 * 2 ** 20),
                         max(3 * phys // 4, 32 * 2 ** 20)))

    flops = 16 * h * N * (h + N) * n_chunks               # 16 half-matmuls/chunk
    bytes_accessed = n_chunks * (2 * h * N * 2 + 4 * h * N * 4) + op_bytes
    cost = pl.CostEstimate(flops=flops, transcendentals=0,
                           bytes_accessed=bytes_accessed)

    kernel = _make_kernel(w, r0, r1, c0, c1)
    yr_s, yi_s = pl.pallas_call(
        kernel,
        out_shape=(jax.ShapeDtypeStruct((h, n_chunks * N), jnp.float32),
                   jax.ShapeDtypeStruct((h, n_chunks * N), jnp.float32)),
        grid=(n_chunks,),
        in_specs=[slab_spec, slab_spec, slab_spec, slab_spec,
                  op_h_spec, op_h_spec, op_h_spec, op_h_spec,
                  op_n_spec, op_n_spec, op_n_spec, op_n_spec],
        out_specs=(slab_spec, slab_spec),
        compiler_params=pltpu.CompilerParams(
            dimension_semantics=("parallel",),
            vmem_limit_bytes=vmem_limit),
        cost_estimate=cost,
    )(xr_s, xi_s, fsr_s, fsi_s, lf_r, lf_i, li_r, li_i, rf_r, rf_i, ri_r, ri_i)

    def from_slab(s):          # (h, n_chunks*N) -> (b, h, w)
        s = jnp.transpose(s.reshape(h, n_chunks, bc, w), (1, 2, 0, 3))
        return s.reshape(b_pad, h, w)[:b]

    return jnp.stack([from_slab(yr_s), from_slab(yi_s)], axis=1)


def _reference(FSsr, hr, shape1, shape2):
    """Plain-JAX transcription of the PyTorch forward (uses jnp.fft)."""
    b, c, h, w = hr.shape
    hr_comp = hr[:, 0:1, :, :] + 1j * hr[:, 1:2, :, :]
    k_hr = (1.0 / math.sqrt(h * w)) * jnp.fft.fftshift(
        jnp.fft.fftn(hr_comp, axes=(2, 3)), axes=(2, 3))
    mask1 = jnp.ones_like(k_hr)
    mask1 = mask1.at[:, :,
                     h // 2 - shape1 // 2: h // 2 + math.ceil(shape1 / 2),
                     w // 2 - shape2 // 2: w // 2 + math.ceil(shape2 / 2)].set(0)
    k_out = FSsr * mask1 + k_hr * (1 - mask1)
    k_out = jnp.fft.ifftshift(k_out, axes=(2, 3))
    x_res = math.sqrt(h * w) * jnp.fft.ifftn(k_out, axes=(2, 3))
    return jnp.concatenate([x_res.real, x_res.imag], axis=1).astype(jnp.float32)


def data_consistency_auto(FSsr, hr, shape1, shape2):
    """Small-problem fallback: tiny planes are launch-overhead dominated, so
    XLA's native FFT wins; the Pallas path pays off from roughly h, w >= 128."""
    _, _, h, w = hr.shape
    if h * w < 64 * 64:
        return _reference(FSsr, hr, shape1, shape2)
    return data_consistency(FSsr, hr, shape1, shape2)


if __name__ == "__main__":
    b, c, h, w = 2, 2, 16, 16
    shape1, shape2 = 6, 6

    key = jax.random.PRNGKey(0)
    k1, k2, k3 = jax.random.split(key, 3)
    hr = jax.random.normal(k1, (b, c, h, w), dtype=jnp.float32)
    FSsr = (jax.random.normal(k2, (b, 1, h, w), dtype=jnp.float32)
            + 1j * jax.random.normal(k3, (b, 1, h, w), dtype=jnp.float32)
            ).astype(jnp.complex64)

    # Exercise the Pallas kernel directly (data_consistency_auto would route
    # this tiny shape to the XLA FFT fallback).
    out = jax.block_until_ready(data_consistency(FSsr, hr, shape1, shape2))
    ref = _reference(FSsr, hr, shape1, shape2)

    assert out.shape == (b, 2, h, w), out.shape
    max_err = float(jnp.max(jnp.abs(out - ref)))
    # bf16 MXU path: tolerance sized for 1-pass bf16 matmuls with f32 accum.
    assert jnp.allclose(out, ref, rtol=3e-2, atol=3e-2), max_err

    print("KERNEL_OK")
</pallas_src>

<mosaic_0001>
module attributes {stable_mosaic.version = 11 : i64} {
  func.func @kernel(%arg0: i32, %arg1: memref<16x128xbf16, #tpu.memory_space<vmem>>, %arg2: memref<16x128xbf16, #tpu.memory_space<vmem>>, %arg3: memref<16x128xf32, #tpu.memory_space<vmem>>, %arg4: memref<16x128xf32, #tpu.memory_space<vmem>>, %arg5: memref<16x16xbf16, #tpu.memory_space<vmem>>, %arg6: memref<16x16xbf16, #tpu.memory_space<vmem>>, %arg7: memref<16x16xbf16, #tpu.memory_space<vmem>>, %arg8: memref<16x16xbf16, #tpu.memory_space<vmem>>, %arg9: memref<128x128xbf16, #tpu.memory_space<vmem>>, %arg10: memref<128x128xbf16, #tpu.memory_space<vmem>>, %arg11: memref<128x128xbf16, #tpu.memory_space<vmem>>, %arg12: memref<128x128xbf16, #tpu.memory_space<vmem>>, %arg13: memref<16x128xf32, #tpu.memory_space<vmem>>, %arg14: memref<16x128xf32, #tpu.memory_space<vmem>>) attributes {dimension_semantics = [#tpu.dimension_semantics<parallel>], iteration_bounds = array<i64: 1>, scalar_prefetch = 0 : i64, scratch_operands = 0 : i64, tpu.core_type = #tpu.core_type<tc>, window_params = [{transform_indices = @transform_0, window_bounds = array<i64: 16, 128>}, {transform_indices = @transform_1, window_bounds = array<i64: 16, 128>}, {transform_indices = @transform_2, window_bounds = array<i64: 16, 128>}, {transform_indices = @transform_3, window_bounds = array<i64: 16, 128>}, {pipeline_mode = #tpu.pipeline_mode<synchronous>, transform_indices = @transform_4, window_bounds = array<i64: 16, 16>}, {pipeline_mode = #tpu.pipeline_mode<synchronous>, transform_indices = @transform_5, window_bounds = array<i64: 16, 16>}, {pipeline_mode = #tpu.pipeline_mode<synchronous>, transform_indices = @transform_6, window_bounds = array<i64: 16, 16>}, {pipeline_mode = #tpu.pipeline_mode<synchronous>, transform_indices = @transform_7, window_bounds = array<i64: 16, 16>}, {pipeline_mode = #tpu.pipeline_mode<synchronous>, transform_indices = @transform_8, window_bounds = array<i64: 128, 128>}, {pipeline_mode = #tpu.pipeline_mode<synchronous>, transform_indices = @transform_9, window_bounds = array<i64: 128, 128>}, {pipeline_mode = #tpu.pipeline_mode<synchronous>, transform_indices = @transform_10, window_bounds = array<i64: 128, 128>}, {pipeline_mode = #tpu.pipeline_mode<synchronous>, transform_indices = @transform_11, window_bounds = array<i64: 128, 128>}, {transform_indices = @transform_12, window_bounds = array<i64: 16, 128>}, {transform_indices = @transform_13, window_bounds = array<i64: 16, 128>}]} {
    %c0 = arith.constant 0 : index
    %c0_0 = arith.constant 0 : index
    %0 = vector.load %arg1[%c0, %c0_0] : memref<16x128xbf16, #tpu.memory_space<vmem>>, vector<16x128xbf16>
    %c0_1 = arith.constant 0 : index
    %c0_2 = arith.constant 0 : index
    %1 = vector.load %arg2[%c0_1, %c0_2] : memref<16x128xbf16, #tpu.memory_space<vmem>>, vector<16x128xbf16>
    %c0_3 = arith.constant 0 : index
    %c0_4 = arith.constant 0 : index
    %2 = vector.load %arg5[%c0_3, %c0_4] : memref<16x16xbf16, #tpu.memory_space<vmem>>, vector<16x16xbf16>
    %cst = arith.constant dense<0.000000e+00> : vector<16x128xf32>
    %3 = tpu.matmul %2, %0, %cst {dimension_numbers = #tpu.dot_dimension_numbers<[1], [0], [0], [1], [0, 0, 1, 1], [], []>} : vector<16x16xbf16>, vector<16x128xbf16>, vector<16x128xf32> -> vector<16x128xf32>
    %c0_5 = arith.constant 0 : index
    %c0_6 = arith.constant 0 : index
    %4 = vector.load %arg6[%c0_5, %c0_6] : memref<16x16xbf16, #tpu.memory_space<vmem>>, vector<16x16xbf16>
    %cst_7 = arith.constant dense<0.000000e+00> : vector<16x128xf32>
    %5 = tpu.matmul %4, %1, %cst_7 {dimension_numbers = #tpu.dot_dimension_numbers<[1], [0], [0], [1], [0, 0, 1, 1], [], []>} : vector<16x16xbf16>, vector<16x128xbf16>, vector<16x128xf32> -> vector<16x128xf32>
    %6 = arith.subf %3, %5 : vector<16x128xf32>
    %c0_8 = arith.constant 0 : index
    %c0_9 = arith.constant 0 : index
    %7 = vector.load %arg6[%c0_8, %c0_9] : memref<16x16xbf16, #tpu.memory_space<vmem>>, vector<16x16xbf16>
    %cst_10 = arith.constant dense<0.000000e+00> : vector<16x128xf32>
    %8 = tpu.matmul %7, %0, %cst_10 {dimension_numbers = #tpu.dot_dimension_numbers<[1], [0], [0], [1], [0, 0, 1, 1], [], []>} : vector<16x16xbf16>, vector<16x128xbf16>, vector<16x128xf32> -> vector<16x128xf32>
    %c0_11 = arith.constant 0 : index
    %c0_12 = arith.constant 0 : index
    %9 = vector.load %arg5[%c0_11, %c0_12] : memref<16x16xbf16, #tpu.memory_space<vmem>>, vector<16x16xbf16>
    %cst_13 = arith.constant dense<0.000000e+00> : vector<16x128xf32>
    %10 = tpu.matmul %9, %1, %cst_13 {dimension_numbers = #tpu.dot_dimension_numbers<[1], [0], [0], [1], [0, 0, 1, 1], [], []>} : vector<16x16xbf16>, vector<16x128xbf16>, vector<16x128xf32> -> vector<16x128xf32>
    %11 = arith.addf %8, %10 : vector<16x128xf32>
    %12 = arith.truncf %6 : vector<16x128xf32> to vector<16x128xbf16>
    %13 = arith.truncf %11 : vector<16x128xf32> to vector<16x128xbf16>
    %c0_14 = arith.constant 0 : index
    %c0_15 = arith.constant 0 : index
    %14 = vector.load %arg9[%c0_14, %c0_15] : memref<128x128xbf16, #tpu.memory_space<vmem>>, vector<128x128xbf16>
    %cst_16 = arith.constant dense<0.000000e+00> : vector<16x128xf32>
    %15 = tpu.matmul %12, %14, %cst_16 {dimension_numbers = #tpu.dot_dimension_numbers<[1], [0], [0], [1], [0, 0, 1, 1], [], []>} : vector<16x128xbf16>, vector<128x128xbf16>, vector<16x128xf32> -> vector<16x128xf32>
    %c0_17 = arith.constant 0 : index
    %c0_18 = arith.constant 0 : index
    %16 = vector.load %arg10[%c0_17, %c0_18] : memref<128x128xbf16, #tpu.memory_space<vmem>>, vector<128x128xbf16>
    %cst_19 = arith.constant dense<0.000000e+00> : vector<16x128xf32>
    %17 = tpu.matmul %13, %16, %cst_19 {dimension_numbers = #tpu.dot_dimension_numbers<[1], [0], [0], [1], [0, 0, 1, 1], [], []>} : vector<16x128xbf16>, vector<128x128xbf16>, vector<16x128xf32> -> vector<16x128xf32>
    %18 = arith.subf %15, %17 : vector<16x128xf32>
    %c0_20 = arith.constant 0 : index
    %c0_21 = arith.constant 0 : index
    %19 = vector.load %arg10[%c0_20, %c0_21] : memref<128x128xbf16, #tpu.memory_space<vmem>>, vector<128x128xbf16>
    %cst_22 = arith.constant dense<0.000000e+00> : vector<16x128xf32>
    %20 = tpu.matmul %12, %19, %cst_22 {dimension_numbers = #tpu.dot_dimension_numbers<[1], [0], [0], [1], [0, 0, 1, 1], [], []>} : vector<16x128xbf16>, vector<128x128xbf16>, vector<16x128xf32> -> vector<16x128xf32>
    %c0_23 = arith.constant 0 : index
    %c0_24 = arith.constant 0 : index
    %21 = vector.load %arg9[%c0_23, %c0_24] : memref<128x128xbf16, #tpu.memory_space<vmem>>, vector<128x128xbf16>
    %cst_25 = arith.constant dense<0.000000e+00> : vector<16x128xf32>
    %22 = tpu.matmul %13, %21, %cst_25 {dimension_numbers = #tpu.dot_dimension_numbers<[1], [0], [0], [1], [0, 0, 1, 1], [], []>} : vector<16x128xbf16>, vector<128x128xbf16>, vector<16x128xf32> -> vector<16x128xf32>
    %23 = arith.addf %20, %22 : vector<16x128xf32>
    %24 = tpu.iota {dimensions = array<i32: 0>} : vector<16x128xi32>
    %25 = tpu.iota {dimensions = array<i32: 1>} : vector<16x128xi32>
    %c16_i32 = arith.constant 16 : i32
    %c0_i32 = arith.constant 0 : i32
    %26 = arith.cmpi eq, %c16_i32, %c0_i32 : i32
    %c1_i32 = arith.constant 1 : i32
    %27 = arith.select %26, %c1_i32, %c16_i32 : i32
    %28 = vector.broadcast %27 : i32 to vector<16x128xi32>
    %29 = arith.remsi %25, %28 : vector<16x128xi32>
    %c0_i32_26 = arith.constant 0 : i32
    %30 = vector.broadcast %c0_i32_26 : i32 to vector<16x128xi32>
    %31 = arith.cmpi ne, %29, %30 : vector<16x128xi32>
    %c0_i32_27 = arith.constant 0 : i32
    %32 = vector.broadcast %c0_i32_27 : i32 to vector<16x128xi32>
    %33 = arith.cmpi slt, %29, %32 : vector<16x128xi32>
    %c0_i32_28 = arith.constant 0 : i32
    %34 = arith.cmpi slt, %27, %c0_i32_28 : i32
    %35 = vector.broadcast %34 : i1 to vector<16x128xi1>
    %36 = vector.broadcast %35 : vector<16x128xi1> to vector<16x128xi1>
    %37 = arith.xori %33, %36 : vector<16x128xi1>
    %38 = arith.andi %37, %31 : vector<16x128xi1>
    %39 = vector.broadcast %27 : i32 to vector<16x128xi32>
    %40 = arith.addi %29, %39 : vector<16x128xi32>
    %41 = arith.select %38, %40, %29 : vector<16x128xi1>, vector<16x128xi32>
    %c5_i32 = arith.constant 5 : i32
    %42 = vector.broadcast %c5_i32 : i32 to vector<16x128xi32>
    %43 = arith.cmpi sge, %24, %42 : vector<16x128xi32>
    %c11_i32 = arith.constant 11 : i32
    %44 = vector.broadcast %c11_i32 : i32 to vector<16x128xi32>
    %45 = arith.cmpi slt, %24, %44 : vector<16x128xi32>
    %46 = arith.andi %43, %45 : vector<16x128xi1>
    %c5_i32_29 = arith.constant 5 : i32
    %47 = vector.broadcast %c5_i32_29 : i32 to vector<16x128xi32>
    %48 = arith.cmpi sge, %41, %47 : vector<16x128xi32>
    %49 = arith.andi %46, %48 : vector<16x128xi1>
    %c11_i32_30 = arith.constant 11 : i32
    %50 = vector.broadcast %c11_i32_30 : i32 to vector<16x128xi32>
    %51 = arith.cmpi slt, %41, %50 : vector<16x128xi32>
    %52 = arith.andi %49, %51 : vector<16x128xi1>
    %c0_31 = arith.constant 0 : index
    %c0_32 = arith.constant 0 : index
    %53 = vector.load %arg3[%c0_31, %c0_32] : memref<16x128xf32, #tpu.memory_space<vmem>>, vector<16x128xf32>
    %54 = arith.select %52, %18, %53 : vector<16x128xi1>, vector<16x128xf32>
    %c0_33 = arith.constant 0 : index
    %c0_34 = arith.constant 0 : index
    %55 = vector.load %arg4[%c0_33, %c0_34] : memref<16x128xf32, #tpu.memory_space<vmem>>, vector<16x128xf32>
    %56 = arith.select %52, %23, %55 : vector<16x128xi1>, vector<16x128xf32>
    %57 = arith.truncf %54 : vector<16x128xf32> to vector<16x128xbf16>
    %58 = arith.truncf %56 : vector<16x128xf32> to vector<16x128xbf16>
    %c0_35 = arith.constant 0 : index
    %c0_36 = arith.constant 0 : index
    %59 = vector.load %arg7[%c0_35, %c0_36] : memref<16x16xbf16, #tpu.memory_space<vmem>>, vector<16x16xbf16>
    %cst_37 = arith.constant dense<0.000000e+00> : vector<16x128xf32>
    %60 = tpu.matmul %59, %57, %cst_37 {dimension_numbers = #tpu.dot_dimension_numbers<[1], [0], [0], [1], [0, 0, 1, 1], [], []>} : vector<16x16xbf16>, vector<16x128xbf16>, vector<16x128xf32> -> vector<16x128xf32>
    %c0_38 = arith.constant 0 : index
    %c0_39 = arith.constant 0 : index
    %61 = vector.load %arg8[%c0_38, %c0_39] : memref<16x16xbf16, #tpu.memory_space<vmem>>, vector<16x16xbf16>
    %cst_40 = arith.constant dense<0.000000e+00> : vector<16x128xf32>
    %62 = tpu.matmul %61, %58, %cst_40 {dimension_numbers = #tpu.dot_dimension_numbers<[1], [0], [0], [1], [0, 0, 1, 1], [], []>} : vector<16x16xbf16>, vector<16x128xbf16>, vector<16x128xf32> -> vector<16x128xf32>
    %63 = arith.subf %60, %62 : vector<16x128xf32>
    %c0_41 = arith.constant 0 : index
    %c0_42 = arith.constant 0 : index
    %64 = vector.load %arg8[%c0_41, %c0_42] : memref<16x16xbf16, #tpu.memory_space<vmem>>, vector<16x16xbf16>
    %cst_43 = arith.constant dense<0.000000e+00> : vector<16x128xf32>
    %65 = tpu.matmul %64, %57, %cst_43 {dimension_numbers = #tpu.dot_dimension_numbers<[1], [0], [0], [1], [0, 0, 1, 1], [], []>} : vector<16x16xbf16>, vector<16x128xbf16>, vector<16x128xf32> -> vector<16x128xf32>
    %c0_44 = arith.constant 0 : index
    %c0_45 = arith.constant 0 : index
    %66 = vector.load %arg7[%c0_44, %c0_45] : memref<16x16xbf16, #tpu.memory_space<vmem>>, vector<16x16xbf16>
    %cst_46 = arith.constant dense<0.000000e+00> : vector<16x128xf32>
    %67 = tpu.matmul %66, %58, %cst_46 {dimension_numbers = #tpu.dot_dimension_numbers<[1], [0], [0], [1], [0, 0, 1, 1], [], []>} : vector<16x16xbf16>, vector<16x128xbf16>, vector<16x128xf32> -> vector<16x128xf32>
    %68 = arith.addf %65, %67 : vector<16x128xf32>
    %69 = arith.truncf %63 : vector<16x128xf32> to vector<16x128xbf16>
    %70 = arith.truncf %68 : vector<16x128xf32> to vector<16x128xbf16>
    %c0_47 = arith.constant 0 : index
    %c0_48 = arith.constant 0 : index
    %71 = vector.load %arg11[%c0_47, %c0_48] : memref<128x128xbf16, #tpu.memory_space<vmem>>, vector<128x128xbf16>
    %cst_49 = arith.constant dense<0.000000e+00> : vector<16x128xf32>
    %72 = tpu.matmul %69, %71, %cst_49 {dimension_numbers = #tpu.dot_dimension_numbers<[1], [0], [0], [1], [0, 0, 1, 1], [], []>} : vector<16x128xbf16>, vector<128x128xbf16>, vector<16x128xf32> -> vector<16x128xf32>
    %c0_50 = arith.constant 0 : index
    %c0_51 = arith.constant 0 : index
    %73 = vector.load %arg12[%c0_50, %c0_51] : memref<128x128xbf16, #tpu.memory_space<vmem>>, vector<128x128xbf16>
    %cst_52 = arith.constant dense<0.000000e+00> : vector<16x128xf32>
    %74 = tpu.matmul %70, %73, %cst_52 {dimension_numbers = #tpu.dot_dimension_numbers<[1], [0], [0], [1], [0, 0, 1, 1], [], []>} : vector<16x128xbf16>, vector<128x128xbf16>, vector<16x128xf32> -> vector<16x128xf32>
    %75 = arith.subf %72, %74 : vector<16x128xf32>
    %c0_53 = arith.constant 0 : index
    %c0_54 = arith.constant 0 : index
    %76 = vector.load %arg13[%c0_53, %c0_54] : memref<16x128xf32, #tpu.memory_space<vmem>>, vector<16x128xf32>
    tpu.vector_store %arg13[%c0_53, %c0_54], %75 {strides = array<i32>} : memref<16x128xf32, #tpu.memory_space<vmem>>, vector<16x128xf32>,
    %c0_55 = arith.constant 0 : index
    %c0_56 = arith.constant 0 : index
    %77 = vector.load %arg12[%c0_55, %c0_56] : memref<128x128xbf16, #tpu.memory_space<vmem>>, vector<128x128xbf16>
    %cst_57 = arith.constant dense<0.000000e+00> : vector<16x128xf32>
    %78 = tpu.matmul %69, %77, %cst_57 {dimension_numbers = #tpu.dot_dimension_numbers<[1], [0], [0], [1], [0, 0, 1, 1], [], []>} : vector<16x128xbf16>, vector<128x128xbf16>, vector<16x128xf32> -> vector<16x128xf32>
    %c0_58 = arith.constant 0 : index
    %c0_59 = arith.constant 0 : index
    %79 = vector.load %arg11[%c0_58, %c0_59] : memref<128x128xbf16, #tpu.memory_space<vmem>>, vector<128x128xbf16>
    %cst_60 = arith.constant dense<0.000000e+00> : vector<16x128xf32>
    %80 = tpu.matmul %70, %79, %cst_60 {dimension_numbers = #tpu.dot_dimension_numbers<[1], [0], [0], [1], [0, 0, 1, 1], [], []>} : vector<16x128xbf16>, vector<128x128xbf16>, vector<16x128xf32> -> vector<16x128xf32>
    %81 = arith.addf %78, %80 : vector<16x128xf32>
    %c0_61 = arith.constant 0 : index
    %c0_62 = arith.constant 0 : index
    %82 = vector.load %arg14[%c0_61, %c0_62] : memref<16x128xf32, #tpu.memory_space<vmem>>, vector<16x128xf32>
    tpu.vector_store %arg14[%c0_61, %c0_62], %81 {strides = array<i32>} : memref<16x128xf32, #tpu.memory_space<vmem>>, vector<16x128xf32>,
    return
  }
  func.func @transform_0(%arg0: i32) -> (i32, i32) {
    %c0_i32 = arith.constant 0 : i32
    %c0_i32_0 = arith.constant 0 : i32
    return %c0_i32, %arg0 : i32, i32
  }
  func.func @transform_1(%arg0: i32) -> (i32, i32) {
    %c0_i32 = arith.constant 0 : i32
    %c0_i32_0 = arith.constant 0 : i32
    return %c0_i32, %arg0 : i32, i32
  }
  func.func @transform_2(%arg0: i32) -> (i32, i32) {
    %c0_i32 = arith.constant 0 : i32
    %c0_i32_0 = arith.constant 0 : i32
    return %c0_i32, %arg0 : i32, i32
  }
  func.func @transform_3(%arg0: i32) -> (i32, i32) {
    %c0_i32 = arith.constant 0 : i32
    %c0_i32_0 = arith.constant 0 : i32
    return %c0_i32, %arg0 : i32, i32
  }
  func.func @transform_4(%arg0: i32) -> (i32, i32) {
    %c0_i32 = arith.constant 0 : i32
    %c0_i32_0 = arith.constant 0 : i32
    %c0_i32_1 = arith.constant 0 : i32
    return %c0_i32, %c0_i32_0 : i32, i32
  }
  func.func @transform_5(%arg0: i32) -> (i32, i32) {
    %c0_i32 = arith.constant 0 : i32
    %c0_i32_0 = arith.constant 0 : i32
    %c0_i32_1 = arith.constant 0 : i32
    return %c0_i32, %c0_i32_0 : i32, i32
  }
  func.func @transform_6(%arg0: i32) -> (i32, i32) {
    %c0_i32 = arith.constant 0 : i32
    %c0_i32_0 = arith.constant 0 : i32
    %c0_i32_1 = arith.constant 0 : i32
    return %c0_i32, %c0_i32_0 : i32, i32
  }
  func.func @transform_7(%arg0: i32) -> (i32, i32) {
    %c0_i32 = arith.constant 0 : i32
    %c0_i32_0 = arith.constant 0 : i32
    %c0_i32_1 = arith.constant 0 : i32
    return %c0_i32, %c0_i32_0 : i32, i32
  }
  func.func @transform_8(%arg0: i32) -> (i32, i32) {
    %c0_i32 = arith.constant 0 : i32
    %c0_i32_0 = arith.constant 0 : i32
    %c0_i32_1 = arith.constant 0 : i32
    return %c0_i32, %c0_i32_0 : i32, i32
  }
  func.func @transform_9(%arg0: i32) -> (i32, i32) {
    %c0_i32 = arith.constant 0 : i32
    %c0_i32_0 = arith.constant 0 : i32
    %c0_i32_1 = arith.constant 0 : i32
    return %c0_i32, %c0_i32_0 : i32, i32
  }
  func.func @transform_10(%arg0: i32) -> (i32, i32) {
    %c0_i32 = arith.constant 0 : i32
    %c0_i32_0 = arith.constant 0 : i32
    %c0_i32_1 = arith.constant 0 : i32
    return %c0_i32, %c0_i32_0 : i32, i32
  }
  func.func @transform_11(%arg0: i32) -> (i32, i32) {
    %c0_i32 = arith.constant 0 : i32
    %c0_i32_0 = arith.constant 0 : i32
    %c0_i32_1 = arith.constant 0 : i32
    return %c0_i32, %c0_i32_0 : i32, i32
  }
  func.func @transform_12(%arg0: i32) -> (i32, i32) {
    %c0_i32 = arith.constant 0 : i32
    %c0_i32_0 = arith.constant 0 : i32
    return %c0_i32, %arg0 : i32, i32
  }
  func.func @transform_13(%arg0: i32) -> (i32, i32) {
    %c0_i32 = arith.constant 0 : i32
    %c0_i32_0 = arith.constant 0 : i32
    return %c0_i32, %arg0 : i32, i32
  }
}

</mosaic_0001>

<llo_original>
// kernel: custom-call.1
$region0: #{custom-call.1}
  %s0 = inlined_call_operand.hbm [shape: c64[2,1,16,16], index: 0, kind: input, shape index: {}]
  %s1 = inlined_call_operand.vmem [shape: f32[2,1,16,16], index: 1, kind: output, shape index: {}]
  %s2 = scalar_lea.hbm %s0, 32
  $region1: #{custom-call.1} parent=0
    #allocation0 [shape = 's32[1]{0}', space=sflag, size = 0x4, scoped, tag = 'scoped memory for custom-call.1']
    %3 = vsyncpa [#allocation0], 0
    %s5 = sshll.u32 %s2, 4
    %s6 = int_to_ptr.hbm [resolvable:$true] %s5
    %s7 = sshll.u32 %s1, 4
    %s8 = int_to_ptr.vmem [resolvable:$true] %s7
    %10 = dma.hbm_to_vmem [thread:$0]  %s6, 512, %s8, [#allocation0]
    %12 = dma.done [#allocation0], 512
    %13 = vsyncpa [#allocation0], 1

// kernel: custom-call
$region0: #{custom-call}
  %s0 = inlined_call_operand.hbm [shape: c64[2,1,16,16], index: 0, kind: input, shape index: {}]
  %s1 = inlined_call_operand.vmem [shape: f32[2,1,16,16], index: 1, kind: output, shape index: {}]
  $region1: #{custom-call} parent=0
    #allocation0 [shape = 's32[1]{0}', space=sflag, size = 0x4, scoped, tag = 'scoped memory for custom-call']
    %2 = vsyncpa [#allocation0], 0
    %s4 = sshll.u32 %s0, 4
    %s5 = int_to_ptr.hbm [resolvable:$true] %s4
    %s6 = sshll.u32 %s1, 4
    %s7 = int_to_ptr.vmem [resolvable:$true] %s6
    %9 = dma.hbm_to_vmem [thread:$0]  %s5, 512, %s7, [#allocation0]
    %11 = dma.done [#allocation0], 512
    %12 = vsyncpa [#allocation0], 1

// kernel: data_consistency.1
$region0: #{data_consistency.1}
  #allocation0 [shape = 'u32[]', space=smem, size = 0x4, offset = 0x4, fixed_abs, tag = 'smem constant byte address 0x4 - core index']
  #allocation1 [shape = 'u32[72,128]{1,0:T(1,128)}', space=vmem, size = 0x9000, scoped, tag = 'internal scratch']
  %s0 = inlined_call_operand.vmem [shape: bf16[16,128], index: 0, kind: input, shape index: {}]
  %s1 = inlined_call_operand.vmem [shape: bf16[16,128], index: 1, kind: input, shape index: {}]
  %s2 = inlined_call_operand.vmem [shape: f32[16,128], index: 2, kind: input, shape index: {}]
  %s3 = inlined_call_operand.vmem [shape: f32[16,128], index: 3, kind: input, shape index: {}]
  %s4 = inlined_call_operand.vmem [shape: bf16[16,16], index: 4, kind: input, shape index: {}]
  %s5 = inlined_call_operand.vmem [shape: bf16[16,16], index: 5, kind: input, shape index: {}]
  %s6 = inlined_call_operand.vmem [shape: bf16[16,16], index: 6, kind: input, shape index: {}]
  %s7 = inlined_call_operand.vmem [shape: bf16[16,16], index: 7, kind: input, shape index: {}]
  %s8 = inlined_call_operand.vmem [shape: bf16[128,128], index: 8, kind: input, shape index: {}]
  %s9 = inlined_call_operand.vmem [shape: bf16[128,128], index: 9, kind: input, shape index: {}]
  %s10 = inlined_call_operand.vmem [shape: bf16[128,128], index: 10, kind: input, shape index: {}]
  %s11 = inlined_call_operand.vmem [shape: bf16[128,128], index: 11, kind: input, shape index: {}]
  %s12 = inlined_call_operand.vmem [shape: f32[16,128], index: 12, kind: output, shape index: {0}]
  %s13 = inlined_call_operand.vmem [shape: f32[16,128], index: 13, kind: output, shape index: {1}]
  %14 = xla_tuple %s12, %s13
  %s15 = sld [smem:[#allocation0]]
  $region66: #{data_consistency.1} parent=0
    _
  %s17 = ssub.s32 1, %s15
  %s18 = scalar_select 0, %s17, %s15
  // Predicated region
  $region2: #{data_consistency.1} parent=0 // pred_check
    _
  $region3: #{data_consistency.1} parent=0 // pred_check_branch
    %20 = sbr.rel (0) target = $region5
  $region4: #{data_consistency.1} parent=0 // pred_region
    _
  $region5: #{data_consistency.1} parent=0 // pred_fallthru
    _
  // Predicated region
  $region6: #{data_consistency.1} parent=0 // pred_check
    _
  $region7: #{data_consistency.1} parent=0 // pred_check_branch
    %22 = sbr.rel (0) target = $region9
  $region8: #{data_consistency.1} parent=0 // pred_region
    _
  $region9: #{data_consistency.1} parent=0 // pred_fallthru
    _
  // Predicated region
  $region10: #{data_consistency.1} parent=0 // pred_check
    _
  $region11: #{data_consistency.1} parent=0 // pred_check_branch
    %24 = sbr.rel (0) target = $region13
  $region12: #{data_consistency.1} parent=0 // pred_region
    _
  $region13: #{data_consistency.1} parent=0 // pred_fallthru
    _
  // Predicated region
  $region14: #{data_consistency.1} parent=0 // pred_check
    _
  $region15: #{data_consistency.1} parent=0 // pred_check_branch
    %26 = sbr.rel (0) target = $region17
  $region16: #{data_consistency.1} parent=0 // pred_region
    _
  $region17: #{data_consistency.1} parent=0 // pred_fallthru
    _
  // Predicated region
  $region18: #{data_consistency.1} parent=0 // pred_check
    _
  $region19: #{data_consistency.1} parent=0 // pred_check_branch
    %28 = sbr.rel (0) target = $region21
  $region20: #{data_consistency.1} parent=0 // pred_region
    _
  $region21: #{data_consistency.1} parent=0 // pred_fallthru
    _
  // Predicated region
  $region22: #{data_consistency.1} parent=0 // pred_check
    _
  $region23: #{data_consistency.1} parent=0 // pred_check_branch
    %30 = sbr.rel (0) target = $region25
  $region24: #{data_consistency.1} parent=0 // pred_region
    _
  $region25: #{data_consistency.1} parent=0 // pred_fallthru
    _
  // Predicated region
  $region26: #{data_consistency.1} parent=0 // pred_check
    _
  $region27: #{data_consistency.1} parent=0 // pred_check_branch
    %32 = sbr.rel (0) target = $region29
  $region28: #{data_consistency.1} parent=0 // pred_region
    _
  $region29: #{data_consistency.1} parent=0 // pred_fallthru
    _
  // Predicated region
  $region30: #{data_consistency.1} parent=0 // pred_check
    _
  $region31: #{data_consistency.1} parent=0 // pred_check_branch
    %34 = sbr.rel (0) target = $region33
  $region32: #{data_consistency.1} parent=0 // pred_region
    _
  $region33: #{data_consistency.1} parent=0 // pred_fallthru
    _
  // Predicated region
  $region34: #{data_consistency.1} parent=0 // pred_check
    _
  $region35: #{data_consistency.1} parent=0 // pred_check_branch
    %36 = sbr.rel (0) target = $region37
  $region36: #{data_consistency.1} parent=0 // pred_region
    _
  $region37: #{data_consistency.1} parent=0 // pred_fallthru
    _
  // Predicated region
  $region38: #{data_consistency.1} parent=0 // pred_check
    _
  $region39: #{data_consistency.1} parent=0 // pred_check_branch
    %38 = sbr.rel (0) target = $region41
  $region40: #{data_consistency.1} parent=0 // pred_region
    _
  $region41: #{data_consistency.1} parent=0 // pred_fallthru
    _
  // Predicated region
  $region42: #{data_consistency.1} parent=0 // pred_check
    _
  $region43: #{data_consistency.1} parent=0 // pred_check_branch
    %40 = sbr.rel (0) target = $region45
  $region44: #{data_consistency.1} parent=0 // pred_region
    _
  $region45: #{data_consistency.1} parent=0 // pred_fallthru
    _
  // Predicated region
  $region46: #{data_consistency.1} parent=0 // pred_check
    _
  $region47: #{data_consistency.1} parent=0 // pred_check_branch
    %42 = sbr.rel (0) target = $region49
  $region48: #{data_consistency.1} parent=0 // pred_region
    _
  $region49: #{data_consistency.1} parent=0 // pred_fallthru
    _
  %v44 = vld [vmem:[%s0] sm:$0xf]
  %v45 = vld [vmem:[%s0 + $0x4] sm:$0xf]
  %v46 = vld [vmem:[%s1] sm:$0xf]
  %v47 = vld [vmem:[%s1 + $0x4] sm:$0xf]
  %v48 = vld [vmem:[%s4] sm:$0xf]
  %v49 = vld [vmem:[%s4 + $0x4] sm:$0xf]
  %v52 = vunpack.c.l.b16 %v48
  %v53 = vunpack.c.l.b16 %v49
  %v54 = vpack.c.b16 %v53, %v52
  %v57 = vunpack.c.l.b16 %v44
  %v58 = vunpack.c.l.b16 %v45
  %v59 = vpack.c.b16 %v58, %v57
  %vm61 = vcmask 130048
  %v63 = vsel %vm61, %v54, 0
  %65 = vmatpush.bf16.msra.mxu0 0
  %66 = vmatpush.bf16.msra.mxu0 0
  %67 = vmatpush.bf16.msra.mxu0 0
  %68 = vmatpush.bf16.msra.mxu0 0
  %69 = vmatpush.bf16.msra.mxu0 0
  %70 = vmatpush.bf16.msra.mxu0 0
  %71 = vmatpush.bf16.msra.mxu0 0
  %72 = vmatpush.bf16.msra.mxu0 %v59
  %73 = vmatmul.bf16.gmra.mxu0 %v63
  %v74 = vpop.f32.mrf.mxu0
  %v75 = vadd.f32 0.0, %v74
  %v76 = vpop.f32.mrf.mxu0
  %v77 = vadd.f32 0.0, %v76
  %78 = vdwg.mxu0
  %v79 = vld [vmem:[%s5] sm:$0xf]
  %v80 = vld [vmem:[%s5 + $0x4] sm:$0xf]
  %v83 = vunpack.c.l.b16 %v79
  %v84 = vunpack.c.l.b16 %v80
  %v85 = vpack.c.b16 %v84, %v83
  %v88 = vunpack.c.l.b16 %v46
  %v89 = vunpack.c.l.b16 %v47
  %v90 = vpack.c.b16 %v89, %v88
  %v93 = vsel %vm61, %v85, 0
  %95 = vmatpush.bf16.msra.mxu0 0
  %96 = vmatpush.bf16.msra.mxu0 0
  %97 = vmatpush.bf16.msra.mxu0 0
  %98 = vmatpush.bf16.msra.mxu0 0
  %99 = vmatpush.bf16.msra.mxu0 0
  %100 = vmatpush.bf16.msra.mxu0 0
  %101 = vmatpush.bf16.msra.mxu0 0
  %102 = vmatpush.bf16.msra.mxu0 %v90
  %103 = vmatmul.bf16.gmra.mxu0 %v93
  %v104 = vpop.f32.mrf.mxu0
  %v105 = vadd.f32 0.0, %v104
  %v106 = vpop.f32.mrf.mxu0
  %v107 = vadd.f32 0.0, %v106
  %108 = vdwg.mxu0
  %v109 = vsub.f32 %v75, %v105
  %v110 = vsub.f32 %v77, %v107
  %111 = vmatpush.bf16.msra.mxu0 0
  %112 = vmatpush.bf16.msra.mxu0 0
  %113 = vmatpush.bf16.msra.mxu0 0
  %114 = vmatpush.bf16.msra.mxu0 0
  %115 = vmatpush.bf16.msra.mxu0 0
  %116 = vmatpush.bf16.msra.mxu0 0
  %117 = vmatpush.bf16.msra.mxu0 0
  %118 = vmatpush.bf16.msra.mxu0 %v90
  %119 = vmatmul.bf16.gmra.mxu0 %v63
  %v120 = vpop.f32.mrf.mxu0
  %v121 = vadd.f32 0.0, %v120
  %v122 = vpop.f32.mrf.mxu0
  %v123 = vadd.f32 0.0, %v122
  %124 = vdwg.mxu0
  %125 = vmatpush.bf16.msra.mxu0 0
  %126 = vmatpush.bf16.msra.mxu0 0
  %127 = vmatpush.bf16.msra.mxu0 0
  %128 = vmatpush.bf16.msra.mxu0 0
  %129 = vmatpush.bf16.msra.mxu0 0
  %130 = vmatpush.bf16.msra.mxu0 0
  %131 = vmatpush.bf16.msra.mxu0 0
  %132 = vmatpush.bf16.msra.mxu0 %v59
  %133 = vmatmul.bf16.gmra.mxu0 %v93
  %v134 = vpop.f32.mrf.mxu0
  %v135 = vadd.f32 %v121, %v134
  %v136 = vpop.f32.mrf.mxu0
  %v137 = vadd.f32 %v123, %v136
  %138 = vdwg.mxu0
  %v139 = vpack.c.bf16 %v110, %v109
  %v140 = vpack.c.bf16 %v137, %v135
  %v141 = vld [vmem:[%s8] sm:$0xf]
  %v142 = vld [vmem:[%s8 + $0x4] sm:$0xf]
  %v143 = vld [vmem:[%s8 + $0x8] sm:$0xf]
  %v144 = vld [vmem:[%s8 + $0xc] sm:$0xf]
  %v145 = vld [vmem:[%s8 + $0x10] sm:$0xf]
  %v146 = vld [vmem:[%s8 + $0x14] sm:$0xf]
  %v147 = vld [vmem:[%s8 + $0x18] sm:$0xf]
  %v148 = vld [vmem:[%s8 + $0x1c] sm:$0xf]
  %v149 = vld [vmem:[%s8 + $0x20] sm:$0xf]
  %v150 = vld [vmem:[%s8 + $0x24] sm:$0xf]
  %v151 = vld [vmem:[%s8 + $0x28] sm:$0xf]
  %v152 = vld [vmem:[%s8 + $0x2c] sm:$0xf]
  %v153 = vld [vmem:[%s8 + $0x30] sm:$0xf]
  %v154 = vld [vmem:[%s8 + $0x34] sm:$0xf]
  %v155 = vld [vmem:[%s8 + $0x38] sm:$0xf]
  %v156 = vld [vmem:[%s8 + $0x3c] sm:$0xf]
  %v173 = vunpack.c.l.b16 %v141
  %v174 = vunpack.c.l.b16 %v142
  %v175 = vunpack.c.l.b16 %v143
  %v176 = vunpack.c.l.b16 %v144
  %v177 = vunpack.c.l.b16 %v145
  %v178 = vunpack.c.l.b16 %v146
  %v179 = vunpack.c.l.b16 %v147
  %v180 = vunpack.c.l.b16 %v148
  %v181 = vunpack.c.l.b16 %v149
  %v182 = vunpack.c.l.b16 %v150
  %v183 = vunpack.c.l.b16 %v151
  %v184 = vunpack.c.l.b16 %v152
  %v185 = vunpack.c.l.b16 %v153
  %v186 = vunpack.c.l.b16 %v154
  %v187 = vunpack.c.l.b16 %v155
  %v188 = vunpack.c.l.b16 %v156
  %v189 = vpack.c.b16 %v174, %v173
  %v190 = vpack.c.b16 %v176, %v175
  %v191 = vpack.c.b16 %v178, %v177
  %v192 = vpack.c.b16 %v180, %v179
  %v193 = vpack.c.b16 %v182, %v181
  %v194 = vpack.c.b16 %v184, %v183
  %v195 = vpack.c.b16 %v186, %v185
  %v196 = vpack.c.b16 %v188, %v187
  %205 = vmatpush.bf16.msra.mxu0 %v196
  %206 = vmatpush.bf16.msra.mxu0 %v195
  %207 = vmatpush.bf16.msra.mxu0 %v194
  %208 = vmatpush.bf16.msra.mxu0 %v193
  %209 = vmatpush.bf16.msra.mxu0 %v192
  %210 = vmatpush.bf16.msra.mxu0 %v191
  %211 = vmatpush.bf16.msra.mxu0 %v190
  %212 = vmatpush.bf16.msra.mxu0 %v189
  %213 = vmatmul.bf16.gmra.mxu0 %v139
  %v214 = vpop.f32.mrf.mxu0
  %v215 = vadd.f32 0.0, %v214
  %v216 = vpop.f32.mrf.mxu0
  %v217 = vadd.f32 0.0, %v216
  %218 = vdwg.mxu0
  %v219 = vld [vmem:[%s9] sm:$0xf]
  %v220 = vld [vmem:[%s9 + $0x4] sm:$0xf]
  %v221 = vld [vmem:[%s9 + $0x8] sm:$0xf]
  %v222 = vld [vmem:[%s9 + $0xc] sm:$0xf]
  %v223 = vld [vmem:[%s9 + $0x10] sm:$0xf]
  %v224 = vld [vmem:[%s9 + $0x14] sm:$0xf]
  %v225 = vld [vmem:[%s9 + $0x18] sm:$0xf]
  %v226 = vld [vmem:[%s9 + $0x1c] sm:$0xf]
  %v227 = vld [vmem:[%s9 + $0x20] sm:$0xf]
  %v228 = vld [vmem:[%s9 + $0x24] sm:$0xf]
  %v229 = vld [vmem:[%s9 + $0x28] sm:$0xf]
  %v230 = vld [vmem:[%s9 + $0x2c] sm:$0xf]
  %v231 = vld [vmem:[%s9 + $0x30] sm:$0xf]
  %v232 = vld [vmem:[%s9 + $0x34] sm:$0xf]
  %v233 = vld [vmem:[%s9 + $0x38] sm:$0xf]
  %v234 = vld [vmem:[%s9 + $0x3c] sm:$0xf]
  %v251 = vunpack.c.l.b16 %v219
  %v252 = vunpack.c.l.b16 %v220
  %v253 = vunpack.c.l.b16 %v221
  %v254 = vunpack.c.l.b16 %v222
  %v255 = vunpack.c.l.b16 %v223
  %v256 = vunpack.c.l.b16 %v224
  %v257 = vunpack.c.l.b16 %v225
  %v258 = vunpack.c.l.b16 %v226
  %v259 = vunpack.c.l.b16 %v227
  %v260 = vunpack.c.l.b16 %v228
  %v261 = vunpack.c.l.b16 %v229
  %v262 = vunpack.c.l.b16 %v230
  %v263 = vunpack.c.l.b16 %v231
  %v264 = vunpack.c.l.b16 %v232
  %v265 = vunpack.c.l.b16 %v233
  %v266 = vunpack.c.l.b16 %v234
  %v267 = vpack.c.b16 %v252, %v251
  %v268 = vpack.c.b16 %v254, %v253
  %v269 = vpack.c.b16 %v256, %v255
  %v270 = vpack.c.b16 %v258, %v257
  %v271 = vpack.c.b16 %v260, %v259
  %v272 = vpack.c.b16 %v262, %v261
  %v273 = vpack.c.b16 %v264, %v263
  %v274 = vpack.c.b16 %v266, %v265
  %283 = vmatpush.bf16.msra.mxu0 %v274
  %284 = vmatpush.bf16.msra.mxu0 %v273
  %285 = vmatpush.bf16.msra.mxu0 %v272
  %286 = vmatpush.bf16.msra.mxu0 %v271
  %287 = vmatpush.bf16.msra.mxu0 %v270
  %288 = vmatpush.bf16.msra.mxu0 %v269
  %289 = vmatpush.bf16.msra.mxu0 %v268
  %290 = vmatpush.bf16.msra.mxu0 %v267
  %291 = vmatmul.bf16.gmra.mxu0 %v140
  %v292 = vpop.f32.mrf.mxu0
  %v293 = vadd.f32 0.0, %v292
  %v294 = vpop.f32.mrf.mxu0
  %v295 = vadd.f32 0.0, %v294
  %296 = vdwg.mxu0
  %v297 = vsub.f32 %v215, %v293
  %v298 = vsub.f32 %v217, %v295
  %299 = vmatpush.bf16.msra.mxu0 %v196
  %300 = vmatpush.bf16.msra.mxu0 %v195
  %301 = vmatpush.bf16.msra.mxu0 %v194
  %302 = vmatpush.bf16.msra.mxu0 %v193
  %303 = vmatpush.bf16.msra.mxu0 %v192
  %304 = vmatpush.bf16.msra.mxu0 %v191
  %305 = vmatpush.bf16.msra.mxu0 %v190
  %306 = vmatpush.bf16.msra.mxu0 %v189
  %307 = vmatmul.bf16.gmra.mxu0 %v140
  %v308 = vpop.f32.mrf.mxu0
  %v309 = vadd.f32 0.0, %v308
  %v310 = vpop.f32.mrf.mxu0
  %v311 = vadd.f32 0.0, %v310
  %312 = vdwg.mxu0
  %313 = vmatpush.bf16.msra.mxu0 %v274
  %314 = vmatpush.bf16.msra.mxu0 %v273
  %315 = vmatpush.bf16.msra.mxu0 %v272
  %316 = vmatpush.bf16.msra.mxu0 %v271
  %317 = vmatpush.bf16.msra.mxu0 %v270
  %318 = vmatpush.bf16.msra.mxu0 %v269
  %319 = vmatpush.bf16.msra.mxu0 %v268
  %320 = vmatpush.bf16.msra.mxu0 %v267
  %321 = vmatmul.bf16.gmra.mxu0 %v139
  %v322 = vpop.f32.mrf.mxu0
  %v323 = vadd.f32 %v309, %v322
  %v324 = vpop.f32.mrf.mxu0
  %v325 = vadd.f32 %v311, %v324
  %326 = vdwg.mxu0
  %v327 = vlaneseq
  %v328 = vshrl.u32 %v327, 7
  %v329 = vadd.s32 %v328, 8
  %v330 = vlaneseq
  %v331 = vand.u32 %v330, 127
  %vm332 = vcmp.lt.s32.totalorder %v331, 0
  %v333 = vsub.s32 0, %v331
  %v334 = vsel %vm332, %v333, %v331
  %v335 = vshrl.u32 %v334, 4
  %v336 = vand.u32 %v334, 15
  %v337 = vsub.s32 0, %v336
  %v338 = vsel %vm332, %v337, %v336
  %vm339 = vcmp.ne.s32.totalorder %v338, 0
  %vm340 = vcmp.lt.s32.totalorder %v338, 0
  %vm341 = vmand %vm340, %vm339
  %v342 = vadd.s32 %v338, 16
  %v343 = vsel %vm341, %v342, %v338
  %vm344 = vcmp.ge.s32.totalorder %v328, 5
  %vm345 = vcmp.ge.s32.totalorder %v329, 5
  %vm346 = vcmp.lt.s32.totalorder %v328, 11
  %vm347 = vcmp.lt.s32.totalorder %v329, 11
  %vm348 = vmand %vm344, %vm346
  %vm349 = vmand %vm345, %vm347
  %vm350 = vcmp.ge.s32.totalorder %v343, 5
  %vm351 = vmand %vm348, %vm350
  %vm352 = vmand %vm349, %vm350
  %vm353 = vcmp.lt.s32.totalorder %v343, 11
  %vm354 = vmand %vm351, %vm353
  %vm355 = vmand %vm352, %vm353
  %v356 = vld [vmem:[%s2] sm:$0xff]
  %v357 = vld [vmem:[%s2 + $0x8] sm:$0xff]
  %v358 = vsel %vm354, %v297, %v356
  %v359 = vsel %vm355, %v298, %v357
  %v360 = vld [vmem:[%s3] sm:$0xff]
  %v361 = vld [vmem:[%s3 + $0x8] sm:$0xff]
  %v362 = vsel %vm354, %v323, %v360
  %v363 = vsel %vm355, %v325, %v361
  %v364 = vpack.c.bf16 %v359, %v358
  %v365 = vpack.c.bf16 %v363, %v362
  %v366 = vld [vmem:[%s6] sm:$0xf]
  %v367 = vld [vmem:[%s6 + $0x4] sm:$0xf]
  %v370 = vunpack.c.l.b16 %v366
  %v371 = vunpack.c.l.b16 %v367
  %v372 = vpack.c.b16 %v371, %v370
  %v374 = vsel %vm61, %v372, 0
  %376 = vmatpush.bf16.msra.mxu0 0
  %377 = vmatpush.bf16.msra.mxu0 0
  %378 = vmatpush.bf16.msra.mxu0 0
  %379 = vmatpush.bf16.msra.mxu0 0
  %380 = vmatpush.bf16.msra.mxu0 0
  %381 = vmatpush.bf16.msra.mxu0 0
  %382 = vmatpush.bf16.msra.mxu0 0
  %383 = vmatpush.bf16.msra.mxu0 %v364
  %384 = vmatmul.bf16.gmra.mxu0 %v374
  %v385 = vpop.f32.mrf.mxu0
  %v386 = vadd.f32 0.0, %v385
  %v387 = vpop.f32.mrf.mxu0
  %v388 = vadd.f32 0.0, %v387
  %389 = vdwg.mxu0
  %v390 = vld [vmem:[%s7] sm:$0xf]
  %v391 = vld [vmem:[%s7 + $0x4] sm:$0xf]
  %v394 = vunpack.c.l.b16 %v390
  %v395 = vunpack.c.l.b16 %v391
  %v396 = vpack.c.b16 %v395, %v394
  %v398 = vsel %vm61, %v396, 0
  %400 = vmatpush.bf16.msra.mxu0 0
  %401 = vmatpush.bf16.msra.mxu0 0
  %402 = vmatpush.bf16.msra.mxu0 0
  %403 = vmatpush.bf16.msra.mxu0 0
  %404 = vmatpush.bf16.msra.mxu0 0
  %405 = vmatpush.bf16.msra.mxu0 0
  %406 = vmatpush.bf16.msra.mxu0 0
  %407 = vmatpush.bf16.msra.mxu0 %v365
  %408 = vmatmul.bf16.gmra.mxu0 %v398
  %v409 = vpop.f32.mrf.mxu0
  %v410 = vadd.f32 0.0, %v409
  %v411 = vpop.f32.mrf.mxu0
  %v412 = vadd.f32 0.0, %v411
  %413 = vdwg.mxu0
  %v414 = vsub.f32 %v386, %v410
  %v415 = vsub.f32 %v388, %v412
  %416 = vmatpush.bf16.msra.mxu0 0
  %417 = vmatpush.bf16.msra.mxu0 0
  %418 = vmatpush.bf16.msra.mxu0 0
  %419 = vmatpush.bf16.msra.mxu0 0
  %420 = vmatpush.bf16.msra.mxu0 0
  %421 = vmatpush.bf16.msra.mxu0 0
  %422 = vmatpush.bf16.msra.mxu0 0
  %423 = vmatpush.bf16.msra.mxu0 %v365
  %424 = vmatmul.bf16.gmra.mxu0 %v374
  %v425 = vpop.f32.mrf.mxu0
  %v426 = vadd.f32 0.0, %v425
  %v427 = vpop.f32.mrf.mxu0
  %v428 = vadd.f32 0.0, %v427
  %429 = vdwg.mxu0
  %430 = vmatpush.bf16.msra.mxu0 0
  %431 = vmatpush.bf16.msra.mxu0 0
  %432 = vmatpush.bf16.msra.mxu0 0
  %433 = vmatpush.bf16.msra.mxu0 0
  %434 = vmatpush.bf16.msra.mxu0 0
  %435 = vmatpush.bf16.msra.mxu0 0
  %436 = vmatpush.bf16.msra.mxu0 0
  %437 = vmatpush.bf16.msra.mxu0 %v364
  %438 = vmatmul.bf16.gmra.mxu0 %v398
  %v439 = vpop.f32.mrf.mxu0
  %v440 = vadd.f32 %v426, %v439
  %v441 = vpop.f32.mrf.mxu0
  %v442 = vadd.f32 %v428, %v441
  %443 = vdwg.mxu0
  %v444 = vpack.c.bf16 %v415, %v414
  %v445 = vpack.c.bf16 %v442, %v440
  %v446 = vld [vmem:[%s10] sm:$0xf]
  %v447 = vld [vmem:[%s10 + $0x4] sm:$0xf]
  %v448 = vld [vmem:[%s10 + $0x8] sm:$0xf]
  %v449 = vld [vmem:[%s10 + $0xc] sm:$0xf]
  %v450 = vld [vmem:[%s10 + $0x10] sm:$0xf]
  %v451 = vld [vmem:[%s10 + $0x14] sm:$0xf]
  %v452 = vld [vmem:[%s10 + $0x18] sm:$0xf]
  %v453 = vld [vmem:[%s10 + $0x1c] sm:$0xf]
  %v454 = vld [vmem:[%s10 + $0x20] sm:$0xf]
  %v455 = vld [vmem:[%s10 + $0x24] sm:$0xf]
  %v456 = vld [vmem:[%s10 + $0x28] sm:$0xf]
  %v457 = vld [vmem:[%s10 + $0x2c] sm:$0xf]
  %v458 = vld [vmem:[%s10 + $0x30] sm:$0xf]
  %v459 = vld [vmem:[%s10 + $0x34] sm:$0xf]
  %v460 = vld [vmem:[%s10 + $0x38] sm:$0xf]
  %v461 = vld [vmem:[%s10 + $0x3c] sm:$0xf]
  %v478 = vunpack.c.l.b16 %v446
  %v479 = vunpack.c.l.b16 %v447
  %v480 = vunpack.c.l.b16 %v448
  %v481 = vunpack.c.l.b16 %v449
  %v482 = vunpack.c.l.b16 %v450
  %v483 = vunpack.c.l.b16 %v451
  %v484 = vunpack.c.l.b16 %v452
  %v485 = vunpack.c.l.b16 %v453
  %v486 = vunpack.c.l.b16 %v454
  %v487 = vunpack.c.l.b16 %v455
  %v488 = vunpack.c.l.b16 %v456
  %v489 = vunpack.c.l.b16 %v457
  %v490 = vunpack.c.l.b16 %v458
  %v491 = vunpack.c.l.b16 %v459
  %v492 = vunpack.c.l.b16 %v460
  %v493 = vunpack.c.l.b16 %v461
  %v494 = vpack.c.b16 %v479, %v478
  %v495 = vpack.c.b16 %v481, %v480
  %v496 = vpack.c.b16 %v483, %v482
  %v497 = vpack.c.b16 %v485, %v484
  %v498 = vpack.c.b16 %v487, %v486
  %v499 = vpack.c.b16 %v489, %v488
  %v500 = vpack.c.b16 %v491, %v490
  %v501 = vpack.c.b16 %v493, %v492
  %510 = vmatpush.bf16.msra.mxu0 %v501
  %511 = vmatpush.bf16.msra.mxu0 %v500
  %512 = vmatpush.bf16.msra.mxu0 %v499
  %513 = vmatpush.bf16.msra.mxu0 %v498
  %514 = vmatpush.bf16.msra.mxu0 %v497
  %515 = vmatpush.bf16.msra.mxu0 %v496
  %516 = vmatpush.bf16.msra.mxu0 %v495
  %517 = vmatpush.bf16.msra.mxu0 %v494
  %518 = vmatmul.bf16.gmra.mxu0 %v444
  %v519 = vpop.f32.mrf.mxu0
  %v520 = vadd.f32 0.0, %v519
  %v521 = vpop.f32.mrf.mxu0
  %v522 = vadd.f32 0.0, %v521
  %523 = vdwg.mxu0
  %v524 = vld [vmem:[%s11] sm:$0xf]
  %v525 = vld [vmem:[%s11 + $0x4] sm:$0xf]
  %v526 = vld [vmem:[%s11 + $0x8] sm:$0xf]
  %v527 = vld [vmem:[%s11 + $0xc] sm:$0xf]
  %v528 = vld [vmem:[%s11 + $0x10] sm:$0xf]
  %v529 = vld [vmem:[%s11 + $0x14] sm:$0xf]
  %v530 = vld [vmem:[%s11 + $0x18] sm:$0xf]
  %v531 = vld [vmem:[%s11 + $0x1c] sm:$0xf]
  %v532 = vld [vmem:[%s11 + $0x20] sm:$0xf]
  %v533 = vld [vmem:[%s11 + $0x24] sm:$0xf]
  %v534 = vld [vmem:[%s11 + $0x28] sm:$0xf]
  %v535 = vld [vmem:[%s11 + $0x2c] sm:$0xf]
  %v536 = vld [vmem:[%s11 + $0x30] sm:$0xf]
  %v537 = vld [vmem:[%s11 + $0x34] sm:$0xf]
  %v538 = vld [vmem:[%s11 + $0x38] sm:$0xf]
  %v539 = vld [vmem:[%s11 + $0x3c] sm:$0xf]
  %v556 = vunpack.c.l.b16 %v524
  %v557 = vunpack.c.l.b16 %v525
  %v558 = vunpack.c.l.b16 %v526
  %v559 = vunpack.c.l.b16 %v527
  %v560 = vunpack.c.l.b16 %v528
  %v561 = vunpack.c.l.b16 %v529
  %v562 = vunpack.c.l.b16 %v530
  %v563 = vunpack.c.l.b16 %v531
  %v564 = vunpack.c.l.b16 %v532
  %v565 = vunpack.c.l.b16 %v533
  %v566 = vunpack.c.l.b16 %v534
  %v567 = vunpack.c.l.b16 %v535
  %v568 = vunpack.c.l.b16 %v536
  %v569 = vunpack.c.l.b16 %v537
  %v570 = vunpack.c.l.b16 %v538
  %v571 = vunpack.c.l.b16 %v539
  %v572 = vpack.c.b16 %v557, %v556
  %v573 = vpack.c.b16 %v559, %v558
  %v574 = vpack.c.b16 %v561, %v560
  %v575 = vpack.c.b16 %v563, %v562
  %v576 = vpack.c.b16 %v565, %v564
  %v577 = vpack.c.b16 %v567, %v566
  %v578 = vpack.c.b16 %v569, %v568
  %v579 = vpack.c.b16 %v571, %v570
  %588 = vmatpush.bf16.msra.mxu0 %v579
  %589 = vmatpush.bf16.msra.mxu0 %v578
  %590 = vmatpush.bf16.msra.mxu0 %v577
  %591 = vmatpush.bf16.msra.mxu0 %v576
  %592 = vmatpush.bf16.msra.mxu0 %v575
  %593 = vmatpush.bf16.msra.mxu0 %v574
  %594 = vmatpush.bf16.msra.mxu0 %v573
  %595 = vmatpush.bf16.msra.mxu0 %v572
  %596 = vmatmul.bf16.gmra.mxu0 %v445
  %v597 = vpop.f32.mrf.mxu0
  %v598 = vadd.f32 0.0, %v597
  %v599 = vpop.f32.mrf.mxu0
  %v600 = vadd.f32 0.0, %v599
  %601 = vdwg.mxu0
  %v602 = vsub.f32 %v520, %v598
  %v603 = vsub.f32 %v522, %v600
  %604 = vst [vmem:[%s12] sm:$0xff] %v602
  %605 = vst [vmem:[%s12 + $0x8] sm:$0xff] %v603
  %v606 = vld [vmem:[%s11] sm:$0xf]
  %v607 = vld [vmem:[%s11 + $0x4] sm:$0xf]
  %v608 = vld [vmem:[%s11 + $0x8] sm:$0xf]
  %v609 = vld [vmem:[%s11 + $0xc] sm:$0xf]
  %v610 = vld [vmem:[%s11 + $0x10] sm:$0xf]
  %v611 = vld [vmem:[%s11 + $0x14] sm:$0xf]
  %v612 = vld [vmem:[%s11 + $0x18] sm:$0xf]
  %v613 = vld [vmem:[%s11 + $0x1c] sm:$0xf]
  %v614 = vld [vmem:[%s11 + $0x20] sm:$0xf]
  %v615 = vld [vmem:[%s11 + $0x24] sm:$0xf]
  %v616 = vld [vmem:[%s11 + $0x28] sm:$0xf]
  %v617 = vld [vmem:[%s11 + $0x2c] sm:$0xf]
  %v618 = vld [vmem:[%s11 + $0x30] sm:$0xf]
  %v619 = vld [vmem:[%s11 + $0x34] sm:$0xf]
  %v620 = vld [vmem:[%s11 + $0x38] sm:$0xf]
  %v621 = vld [vmem:[%s11 + $0x3c] sm:$0xf]
  %v622 = vld [vmem:[%s10] sm:$0xf]
  %v623 = vld [vmem:[%s10 + $0x4] sm:$0xf]
  %v624 = vld [vmem:[%s10 + $0x8] sm:$0xf]
  %v625 = vld [vmem:[%s10 + $0xc] sm:$0xf]
  %v626 = vld [vmem:[%s10 + $0x10] sm:$0xf]
  %v627 = vld [vmem:[%s10 + $0x14] sm:$0xf]
  %v628 = vld [vmem:[%s10 + $0x18] sm:$0xf]
  %v629 = vld [vmem:[%s10 + $0x1c] sm:$0xf]
  %v630 = vld [vmem:[%s10 + $0x20] sm:$0xf]
  %v631 = vld [vmem:[%s10 + $0x24] sm:$0xf]
  %v632 = vld [vmem:[%s10 + $0x28] sm:$0xf]
  %v633 = vld [vmem:[%s10 + $0x2c] sm:$0xf]
  %v634 = vld [vmem:[%s10 + $0x30] sm:$0xf]
  %v635 = vld [vmem:[%s10 + $0x34] sm:$0xf]
  %v636 = vld [vmem:[%s10 + $0x38] sm:$0xf]
  %v637 = vld [vmem:[%s10 + $0x3c] sm:$0xf]
  %v654 = vunpack.c.l.b16 %v622
  %v655 = vunpack.c.l.b16 %v623
  %v656 = vunpack.c.l.b16 %v624
  %v657 = vunpack.c.l.b16 %v625
  %v658 = vunpack.c.l.b16 %v626
  %v659 = vunpack.c.l.b16 %v627
  %v660 = vunpack.c.l.b16 %v628
  %v661 = vunpack.c.l.b16 %v629
  %v662 = vunpack.c.l.b16 %v630
  %v663 = vunpack.c.l.b16 %v631
  %v664 = vunpack.c.l.b16 %v632
  %v665 = vunpack.c.l.b16 %v633
  %v666 = vunpack.c.l.b16 %v634
  %v667 = vunpack.c.l.b16 %v635
  %v668 = vunpack.c.l.b16 %v636
  %v669 = vunpack.c.l.b16 %v637
  %v670 = vpack.c.b16 %v655, %v654
  %v671 = vpack.c.b16 %v657, %v656
  %v672 = vpack.c.b16 %v659, %v658
  %v673 = vpack.c.b16 %v661, %v660
  %v674 = vpack.c.b16 %v663, %v662
  %v675 = vpack.c.b16 %v665, %v664
  %v676 = vpack.c.b16 %v667, %v666
  %v677 = vpack.c.b16 %v669, %v668
  %686 = vmatpush.bf16.msra.mxu0 %v677
  %687 = vmatpush.bf16.msra.mxu0 %v676
  %688 = vmatpush.bf16.msra.mxu0 %v675
  %689 = vmatpush.bf16.msra.mxu0 %v674
  %690 = vmatpush.bf16.msra.mxu0 %v673
  %691 = vmatpush.bf16.msra.mxu0 %v672
  %692 = vmatpush.bf16.msra.mxu0 %v671
  %693 = vmatpush.bf16.msra.mxu0 %v670
  %694 = vmatmul.bf16.gmra.mxu0 %v445
  %v695 = vpop.f32.mrf.mxu0
  %v696 = vadd.f32 0.0, %v695
  %v697 = vpop.f32.mrf.mxu0
  %v698 = vadd.f32 0.0, %v697
  %699 = vdwg.mxu0
  %v716 = vunpack.c.l.b16 %v606
  %v717 = vunpack.c.l.b16 %v607
  %v718 = vunpack.c.l.b16 %v608
  %v719 = vunpack.c.l.b16 %v609
  %v720 = vunpack.c.l.b16 %v610
  %v721 = vunpack.c.l.b16 %v611
  %v722 = vunpack.c.l.b16 %v612
  %v723 = vunpack.c.l.b16 %v613
  %v724 = vunpack.c.l.b16 %v614
  %v725 = vunpack.c.l.b16 %v615
  %v726 = vunpack.c.l.b16 %v616
  %v727 = vunpack.c.l.b16 %v617
  %v728 = vunpack.c.l.b16 %v618
  %v729 = vunpack.c.l.b16 %v619
  %v730 = vunpack.c.l.b16 %v620
  %v731 = vunpack.c.l.b16 %v621
  %v732 = vpack.c.b16 %v717, %v716
  %v733 = vpack.c.b16 %v719, %v718
  %v734 = vpack.c.b16 %v721, %v720
  %v735 = vpack.c.b16 %v723, %v722
  %v736 = vpack.c.b16 %v725, %v724
  %v737 = vpack.c.b16 %v727, %v726
  %v738 = vpack.c.b16 %v729, %v728
  %v739 = vpack.c.b16 %v731, %v730
  %748 = vmatpush.bf16.msra.mxu0 %v739
  %749 = vmatpush.bf16.msra.mxu0 %v738
  %750 = vmatpush.bf16.msra.mxu0 %v737
  %751 = vmatpush.bf16.msra.mxu0 %v736
  %752 = vmatpush.bf16.msra.mxu0 %v735
  %753 = vmatpush.bf16.msra.mxu0 %v734
  %754 = vmatpush.bf16.msra.mxu0 %v733
  %755 = vmatpush.bf16.msra.mxu0 %v732
  %756 = vmatmul.bf16.gmra.mxu0 %v444
  %v757 = vpop.f32.mrf.mxu0
  %v758 = vadd.f32 %v696, %v757
  %v759 = vpop.f32.mrf.mxu0
  %v760 = vadd.f32 %v698, %v759
  %761 = vdwg.mxu0
  %762 = vst [vmem:[%s13] sm:$0xff] %v758
  %763 = vst [vmem:[%s13 + $0x8] sm:$0xff] %v760
  // Predicated region
  $region50: #{data_consistency.1} parent=0 // pred_check
    _
  $region51: #{data_consistency.1} parent=0 // pred_check_branch
    %765 = sbr.rel (0) target = $region53
  $region52: #{data_consistency.1} parent=0 // pred_region
    _
  $region53: #{data_consistency.1} parent=0 // pred_fallthru
    _
  // Predicated region
  $region54: #{data_consistency.1} parent=0 // pred_check
    _
  $region55: #{data_consistency.1} parent=0 // pred_check_branch
    %767 = sbr.rel (0) target = $region57
  $region56: #{data_consistency.1} parent=0 // pred_region
    _
  $region57: #{data_consistency.1} parent=0 // pred_fallthru
    _
  // Predicated region
  $region58: #{data_consistency.1} parent=0 // pred_check
    _
  $region59: #{data_consistency.1} parent=0 // pred_check_branch
    %769 = sbr.rel (0) target = $region61
  $region60: #{data_consistency.1} parent=0 // pred_region
    _
  $region61: #{data_consistency.1} parent=0 // pred_fallthru
    _
  // Predicated region
  $region62: #{data_consistency.1} parent=0 // pred_check
    _
  $region63: #{data_consistency.1} parent=0 // pred_check_branch
    %771 = sbr.rel (0) target = $region65
  $region64: #{data_consistency.1} parent=0 // pred_region
    _
  $region65: #{data_consistency.1} parent=0 // pred_fallthru
    _

</llo_original>
